<compile_context>
chip_gen: v6e
topology: v6e:2x2x1
jax: 0.10.0
libtpu: 0.0.40
codegen_flags: <defaults>
</compile_context>

<pallas_src>
import math
import functools

import jax
import jax.numpy as jnp
from jax.experimental import pallas as pl
from jax.experimental.pallas import tpu as pltpu

IN_FEATURES = 300
K_PAD = 384  # 300 rounded up to a multiple of 128


def text_encoder_kernel(x_ref, w_ref, b_ref, o_ref):
    # x_ref: (TB, K_PAD)  w_ref: (K_PAD, E)  b_ref: (1, E)  o_ref: (TB, E)
    x = jnp.maximum(x_ref[...], 0.0)                          # ReLU (VPU)
    y = jnp.dot(x, w_ref[...],
                preferred_element_type=jnp.float32)           # MXU matmul
    y = y + b_ref[...]                                        # bias broadcast over batch
    # L2 normalize per row (PyTorch: x / x.pow(2).sum(1, keepdim=True).sqrt()).
    # rsqrt lowers to the EUP (its own bundle slot); the remaining mul is one VPU op.
    sumsq = jnp.sum(y * y, axis=1, keepdims=True)
    o_ref[...] = y * jax.lax.rsqrt(sumsq)


@functools.partial(jax.jit, static_argnames=("block_b",))
def text_encoder(x, w, b, *, block_b=256):
    B, K = x.shape
    Kw, E = w.shape
    assert K == IN_FEATURES and Kw == IN_FEATURES

    # Batch tile: MXU-aligned 256 rows for real workloads; for tiny demo batches just round
    # the batch up to the (8, *) sublane granularity and run a single grid step.
    tb = block_b if B >= block_b else max(8, ((B + 7) // 8) * 8)
    pad_b = (-B) % tb
    pad_k = K_PAD - K

    # Zero padding is exact: ReLU(0)=0 and zero weight rows add nothing; padded batch rows
    # are sliced off at the end.
    xp = jnp.pad(x, ((0, pad_b), (0, pad_k)))
    wp = jnp.pad(w, ((0, pad_k), (0, 0)))
    b2 = b.reshape(1, E)

    Bp = B + pad_b
    grid = (Bp // tb,)

    flops = 2 * Bp * K_PAD * E
    bytes_accessed = 4 * (Bp * K_PAD + K_PAD * E + E + Bp * E)

    out = pl.pallas_call(
        text_encoder_kernel,
        out_shape=jax.ShapeDtypeStruct((Bp, E), jnp.float32),
        grid=grid,
        in_specs=[
            pl.BlockSpec((tb, K_PAD), lambda i: (i, 0)),   # batch-tiled, double-buffered
            pl.BlockSpec((K_PAD, E), lambda i: (0, 0)),    # weight resident across grid
            pl.BlockSpec((1, E), lambda i: (0, 0)),        # bias resident across grid
        ],
        out_specs=pl.BlockSpec((tb, E), lambda i: (i, 0)),
        compiler_params=pltpu.CompilerParams(
            dimension_semantics=("parallel",)),            # rows independent -> megacore OK
        cost_estimate=pl.CostEstimate(
            flops=flops, transcendentals=Bp, bytes_accessed=bytes_accessed),
    )(xp, wp, b2)
    return out[:B]


def init_params(key, in_features=IN_FEATURES, embedding_size=128):
    # Mimic torch.nn.init.kaiming_uniform_(weight, mode='fan_in', nonlinearity='relu'):
    #   gain = sqrt(2), bound = gain * sqrt(3 / fan_in)
    kw, kb = jax.random.split(key)
    fan_in = in_features
    w_bound = math.sqrt(2.0) * math.sqrt(3.0 / fan_in)
    # Torch stores weight as (out, in); we keep the transposed (in, out) layout for the kernel.
    w = jax.random.uniform(kw, (in_features, embedding_size),
                           minval=-w_bound, maxval=w_bound, dtype=jnp.float32)
    # Default torch Linear bias init: U(-1/sqrt(fan_in), 1/sqrt(fan_in))
    b_bound = 1.0 / math.sqrt(fan_in)
    b = jax.random.uniform(kb, (embedding_size,),
                           minval=-b_bound, maxval=b_bound, dtype=jnp.float32)
    return w, b


if __name__ == "__main__":
    key = jax.random.PRNGKey(0)
    k_x, k_p = jax.random.split(key)

    batch = 8
    embedding_size = 128    # small synthetic embedding size (module default is 1000)

    x = jax.random.normal(k_x, (batch, IN_FEATURES), dtype=jnp.float32)
    w, b = init_params(k_p, IN_FEATURES, embedding_size)

    out = text_encoder(x, w, b)
    jax.block_until_ready(out)

    # Pure-JAX reference of the same semantics (full-precision matmul for a fair check).
    xr = jnp.maximum(x, 0.0)
    yr = jnp.dot(xr, w, precision=jax.lax.Precision.HIGHEST) + b
    ref = yr / jnp.sqrt(jnp.sum(yr * yr, axis=1, keepdims=True))

    assert out.shape == (batch, embedding_size)
    assert jnp.allclose(out, ref, atol=1e-5, rtol=1e-5)

    print("KERNEL_OK")
</pallas_src>

<mosaic_0001>
module attributes {stable_mosaic.version = 11 : i64} {
  func.func @text_encoder_kernel(%arg0: i32, %arg1: memref<8x384xf32, #tpu.memory_space<vmem>>, %arg2: memref<384x128xf32, #tpu.memory_space<vmem>>, %arg3: memref<1x128xf32, #tpu.memory_space<vmem>>, %arg4: memref<8x128xf32, #tpu.memory_space<vmem>>) attributes {dimension_semantics = [#tpu.dimension_semantics<parallel>], iteration_bounds = array<i64: 1>, scalar_prefetch = 0 : i64, scratch_operands = 0 : i64, tpu.core_type = #tpu.core_type<tc>, window_params = [{transform_indices = @transform_0, window_bounds = array<i64: 8, 384>}, {pipeline_mode = #tpu.pipeline_mode<synchronous>, transform_indices = @transform_1, window_bounds = array<i64: 384, 128>}, {pipeline_mode = #tpu.pipeline_mode<synchronous>, transform_indices = @transform_2, window_bounds = array<i64: 1, 128>}, {transform_indices = @transform_3, window_bounds = array<i64: 8, 128>}]} {
    %c0 = arith.constant 0 : index
    %c0_0 = arith.constant 0 : index
    %0 = vector.load %arg1[%c0, %c0_0] : memref<8x384xf32, #tpu.memory_space<vmem>>, vector<8x384xf32>
    %cst = arith.constant 0.000000e+00 : f32
    %1 = vector.broadcast %cst : f32 to vector<8x384xf32>
    %2 = arith.maximumf %0, %1 : vector<8x384xf32>
    %c0_1 = arith.constant 0 : index
    %c0_2 = arith.constant 0 : index
    %3 = vector.load %arg2[%c0_1, %c0_2] : memref<384x128xf32, #tpu.memory_space<vmem>>, vector<384x128xf32>
    %cst_3 = arith.constant dense<0.000000e+00> : vector<8x128xf32>
    %4 = tpu.matmul %2, %3, %cst_3 {dimension_numbers = #tpu.dot_dimension_numbers<[1], [0], [0], [1], [0, 0, 1, 1], [], []>} : vector<8x384xf32>, vector<384x128xf32>, vector<8x128xf32> -> vector<8x128xf32>
    %c0_4 = arith.constant 0 : index
    %c0_5 = arith.constant 0 : index
    %5 = vector.load %arg3[%c0_4, %c0_5] : memref<1x128xf32, #tpu.memory_space<vmem>>, vector<1x128xf32>
    %6 = vector.broadcast %5 : vector<1x128xf32> to vector<8x128xf32>
    %7 = arith.addf %4, %6 : vector<8x128xf32>
    %8 = arith.mulf %7, %7 : vector<8x128xf32>
    %cst_6 = arith.constant dense<0.000000e+00> : vector<8xf32>
    %9 = vector.multi_reduction <add>, %8, %cst_6 [1] : vector<8x128xf32> to vector<8xf32>
    %10 = vector.shape_cast %9 : vector<8xf32> to vector<8x1xf32>
    %11 = math.rsqrt %10 : vector<8x1xf32>
    %12 = vector.broadcast %11 : vector<8x1xf32> to vector<8x128xf32>
    %13 = arith.mulf %7, %12 : vector<8x128xf32>
    %c0_7 = arith.constant 0 : index
    %c0_8 = arith.constant 0 : index
    %14 = vector.load %arg4[%c0_7, %c0_8] : memref<8x128xf32, #tpu.memory_space<vmem>>, vector<8x128xf32>
    tpu.vector_store %arg4[%c0_7, %c0_8], %13 {strides = array<i32>} : memref<8x128xf32, #tpu.memory_space<vmem>>, vector<8x128xf32>,
    return
  }
  func.func @transform_0(%arg0: i32) -> (i32, i32) {
    %c0_i32 = arith.constant 0 : i32
    %c0_i32_0 = arith.constant 0 : i32
    return %arg0, %c0_i32 : i32, i32
  }
  func.func @transform_1(%arg0: i32) -> (i32, i32) {
    %c0_i32 = arith.constant 0 : i32
    %c0_i32_0 = arith.constant 0 : i32
    %c0_i32_1 = arith.constant 0 : i32
    return %c0_i32, %c0_i32_0 : i32, i32
  }
  func.func @transform_2(%arg0: i32) -> (i32, i32) {
    %c0_i32 = arith.constant 0 : i32
    %c0_i32_0 = arith.constant 0 : i32
    %c0_i32_1 = arith.constant 0 : i32
    return %c0_i32, %c0_i32_0 : i32, i32
  }
  func.func @transform_3(%arg0: i32) -> (i32, i32) {
    %c0_i32 = arith.constant 0 : i32
    %c0_i32_0 = arith.constant 0 : i32
    return %arg0, %c0_i32 : i32, i32
  }
}

</mosaic_0001>

<llo_original>
// kernel: text_encoder.1
$region0: #{text_encoder.1}
  #allocation0 [shape = 'u32[]', space=smem, size = 0x4, offset = 0x4, fixed_abs, tag = 'smem constant byte address 0x4 - core index']
  #allocation1 [shape = 'u32[144,128]{1,0:T(1,128)}', space=vmem, size = 0x12000, scoped, tag = 'internal scratch']
  %s0 = inlined_call_operand.vmem [shape: f32[8,384], index: 0, kind: input, shape index: {}]
  %s1 = inlined_call_operand.vmem [shape: f32[384,128], index: 1, kind: input, shape index: {}]
  %s2 = inlined_call_operand.vmem [shape: f32[1,128], index: 2, kind: input, shape index: {}]
  %s3 = inlined_call_operand.hbm [shape: f32[8,128], index: 3, kind: output, shape index: {}]
  %s4 = sld [smem:[#allocation0]]
  $region22: #{text_encoder.1} parent=0
    _
  %s6 = ssub.s32 1, %s4
  %s7 = scalar_select 0, %s6, %s4
  $region1: #{text_encoder.1} parent=0
    #allocation2 [shape = 'u8[4096]{0}', space=vmem, size = 0x1000, scoped, tag = 'output window, operand 0, single buffered']
    #allocation3 [shape = 's32[1]{0}', space=sflag, size = 0x4, scoped, tag = 'scoped memory for text_encoder.1']
    %8 = vsyncpa [#allocation3], 0
    // Predicated region
    $region2: #{text_encoder.1} parent=1 // pred_check
      _
    $region3: #{text_encoder.1} parent=1 // pred_check_branch
      %10 = sbr.rel (0) target = $region5
    $region4: #{text_encoder.1} parent=1 // pred_region
      _
    $region5: #{text_encoder.1} parent=1 // pred_fallthru
      _
    // Predicated region
    $region6: #{text_encoder.1} parent=1 // pred_check
      _
    $region7: #{text_encoder.1} parent=1 // pred_check_branch
      %12 = sbr.rel (0) target = $region9
    $region8: #{text_encoder.1} parent=1 // pred_region
      _
    $region9: #{text_encoder.1} parent=1 // pred_fallthru
      _
    // Predicated region
    $region10: #{text_encoder.1} parent=1 // pred_check
      _
    $region11: #{text_encoder.1} parent=1 // pred_check_branch
      %14 = sbr.rel (0) target = $region13
    $region12: #{text_encoder.1} parent=1 // pred_region
      _
    $region13: #{text_encoder.1} parent=1 // pred_fallthru
      _
    %v15 = vld [vmem:[%s0] sm:$0xff]
    %v16 = vld [vmem:[%s0 + $0x8] sm:$0xff]
    %v17 = vld [vmem:[%s0 + $0x10] sm:$0xff]
    %v18 = vmax.f32 %v15, 0.0
    %v19 = vmax.f32 %v16, 0.0
    %v20 = vmax.f32 %v17, 0.0
    %v21 = vld [vmem:[%s1] sm:$0xff]
    %v22 = vld [vmem:[%s1 + $0x8] sm:$0xff]
    %v23 = vld [vmem:[%s1 + $0x10] sm:$0xff]
    %v24 = vld [vmem:[%s1 + $0x18] sm:$0xff]
    %v25 = vld [vmem:[%s1 + $0x20] sm:$0xff]
    %v26 = vld [vmem:[%s1 + $0x28] sm:$0xff]
    %v27 = vld [vmem:[%s1 + $0x30] sm:$0xff]
    %v28 = vld [vmem:[%s1 + $0x38] sm:$0xff]
    %v29 = vld [vmem:[%s1 + $0x40] sm:$0xff]
    %v30 = vld [vmem:[%s1 + $0x48] sm:$0xff]
    %v31 = vld [vmem:[%s1 + $0x50] sm:$0xff]
    %v32 = vld [vmem:[%s1 + $0x58] sm:$0xff]
    %v33 = vld [vmem:[%s1 + $0x60] sm:$0xff]
    %v34 = vld [vmem:[%s1 + $0x68] sm:$0xff]
    %v35 = vld [vmem:[%s1 + $0x70] sm:$0xff]
    %v36 = vld [vmem:[%s1 + $0x78] sm:$0xff]
    %v37 = vld [vmem:[%s1 + $0x80] sm:$0xff]
    %v38 = vld [vmem:[%s1 + $0x88] sm:$0xff]
    %v39 = vld [vmem:[%s1 + $0x90] sm:$0xff]
    %v40 = vld [vmem:[%s1 + $0x98] sm:$0xff]
    %v41 = vld [vmem:[%s1 + $0xa0] sm:$0xff]
    %v42 = vld [vmem:[%s1 + $0xa8] sm:$0xff]
    %v43 = vld [vmem:[%s1 + $0xb0] sm:$0xff]
    %v44 = vld [vmem:[%s1 + $0xb8] sm:$0xff]
    %v45 = vld [vmem:[%s1 + $0xc0] sm:$0xff]
    %v46 = vld [vmem:[%s1 + $0xc8] sm:$0xff]
    %v47 = vld [vmem:[%s1 + $0xd0] sm:$0xff]
    %v48 = vld [vmem:[%s1 + $0xd8] sm:$0xff]
    %v49 = vld [vmem:[%s1 + $0xe0] sm:$0xff]
    %v50 = vld [vmem:[%s1 + $0xe8] sm:$0xff]
    %v51 = vld [vmem:[%s1 + $0xf0] sm:$0xff]
    %v52 = vld [vmem:[%s1 + $0xf8] sm:$0xff]
    %v53 = vld [vmem:[%s1 + $0x100] sm:$0xff]
    %v54 = vld [vmem:[%s1 + $0x108] sm:$0xff]
    %v55 = vld [vmem:[%s1 + $0x110] sm:$0xff]
    %v56 = vld [vmem:[%s1 + $0x118] sm:$0xff]
    %v57 = vld [vmem:[%s1 + $0x120] sm:$0xff]
    %v58 = vld [vmem:[%s1 + $0x128] sm:$0xff]
    %v59 = vld [vmem:[%s1 + $0x130] sm:$0xff]
    %v60 = vld [vmem:[%s1 + $0x138] sm:$0xff]
    %v61 = vld [vmem:[%s1 + $0x140] sm:$0xff]
    %v62 = vld [vmem:[%s1 + $0x148] sm:$0xff]
    %v63 = vld [vmem:[%s1 + $0x150] sm:$0xff]
    %v64 = vld [vmem:[%s1 + $0x158] sm:$0xff]
    %v65 = vld [vmem:[%s1 + $0x160] sm:$0xff]
    %v66 = vld [vmem:[%s1 + $0x168] sm:$0xff]
    %v67 = vld [vmem:[%s1 + $0x170] sm:$0xff]
    %v68 = vld [vmem:[%s1 + $0x178] sm:$0xff]
    %v69 = vld [vmem:[%s2] sm:$0x1]
    %v71 = vlaneseq
    %v72 = vshrl.u32 %v71, 7
    %v73 = vsub.s32 0, %v72
    %v74 = vrot.slane %v69, %v73
    %76 = vmatprep.subr.mxu0 0.0
    %77 = vmatpush1.msra.mxu0 %v36
    %78 = vmatprep.subr.mxu0 0.0
    %79 = vmatpush1.msra.mxu0 %v35
    %80 = vmatprep.subr.mxu0 0.0
    %81 = vmatpush1.msra.mxu0 %v34
    %82 = vmatprep.subr.mxu0 0.0
    %83 = vmatpush1.msra.mxu0 %v33
    %84 = vmatprep.subr.mxu0 0.0
    %85 = vmatpush1.msra.mxu0 %v32
    %86 = vmatprep.subr.mxu0 0.0
    %87 = vmatpush1.msra.mxu0 %v31
    %88 = vmatprep.subr.mxu0 0.0
    %89 = vmatpush1.msra.mxu0 %v30
    %90 = vmatprep.subr.mxu0 0.0
    %91 = vmatpush1.msra.mxu0 %v29
    %92 = vmatprep.subr.mxu0 0.0
    %93 = vmatpush1.msra.mxu0 %v28
    %94 = vmatprep.subr.mxu0 0.0
    %95 = vmatpush1.msra.mxu0 %v27
    %96 = vmatprep.subr.mxu0 0.0
    %97 = vmatpush1.msra.mxu0 %v26
    %98 = vmatprep.subr.mxu0 0.0
    %99 = vmatpush1.msra.mxu0 %v25
    %100 = vmatprep.subr.mxu0 0.0
    %101 = vmatpush1.msra.mxu0 %v24
    %102 = vmatprep.subr.mxu0 0.0
    %103 = vmatpush1.msra.mxu0 %v23
    %104 = vmatprep.subr.mxu0 0.0
    %105 = vmatpush1.msra.mxu0 %v22
    %106 = vmatprep.subr.mxu0 0.0
    %107 = vmatpush1.msra.mxu0 %v21
    %108 = vmatprep.subr.mxu0 0.0
    %109 = vmatpush2.msra.mxu0 %v52
    %110 = vmatprep.subr.mxu0 0.0
    %111 = vmatpush2.msra.mxu0 %v51
    %112 = vmatprep.subr.mxu0 0.0
    %113 = vmatpush2.msra.mxu0 %v50
    %114 = vmatprep.subr.mxu0 0.0
    %115 = vmatpush2.msra.mxu0 %v49
    %116 = vmatprep.subr.mxu0 0.0
    %117 = vmatpush2.msra.mxu0 %v48
    %118 = vmatprep.subr.mxu0 0.0
    %119 = vmatpush2.msra.mxu0 %v47
    %120 = vmatprep.subr.mxu0 0.0
    %121 = vmatpush2.msra.mxu0 %v46
    %122 = vmatprep.subr.mxu0 0.0
    %123 = vmatpush2.msra.mxu0 %v45
    %124 = vmatprep.subr.mxu0 0.0
    %125 = vmatpush2.msra.mxu0 %v44
    %126 = vmatprep.subr.mxu0 0.0
    %127 = vmatpush2.msra.mxu0 %v43
    %128 = vmatprep.subr.mxu0 0.0
    %129 = vmatpush2.msra.mxu0 %v42
    %130 = vmatprep.subr.mxu0 0.0
    %131 = vmatpush2.msra.mxu0 %v41
    %132 = vmatprep.subr.mxu0 0.0
    %133 = vmatpush2.msra.mxu0 %v40
    %134 = vmatprep.subr.mxu0 0.0
    %135 = vmatpush2.msra.mxu0 %v39
    %136 = vmatprep.subr.mxu0 0.0
    %137 = vmatpush2.msra.mxu0 %v38
    %138 = vmatprep.subr.mxu0 0.0
    %139 = vmatpush2.msra.mxu0 %v37
    %140 = vmatprep.mubr.f32.mxu0 %v19
    %141 = vmatmul.mubr.f32.gmra.mxu0 %v18
    %v142 = vpop.f32.mrf.mxu0
    %v143 = vadd.f32 %v74, %v142
    %v144 = vpop.f32.mrf.mxu0
    %145 = vdwg.mxu0
    %146 = vmatprep.subr.mxu0 0.0
    %147 = vmatpush1.msra.mxu0 %v68
    %148 = vmatprep.subr.mxu0 0.0
    %149 = vmatpush1.msra.mxu0 %v67
    %150 = vmatprep.subr.mxu0 0.0
    %151 = vmatpush1.msra.mxu0 %v66
    %152 = vmatprep.subr.mxu0 0.0
    %153 = vmatpush1.msra.mxu0 %v65
    %154 = vmatprep.subr.mxu0 0.0
    %155 = vmatpush1.msra.mxu0 %v64
    %156 = vmatprep.subr.mxu0 0.0
    %157 = vmatpush1.msra.mxu0 %v63
    %158 = vmatprep.subr.mxu0 0.0
    %159 = vmatpush1.msra.mxu0 %v62
    %160 = vmatprep.subr.mxu0 0.0
    %161 = vmatpush1.msra.mxu0 %v61
    %162 = vmatprep.subr.mxu0 0.0
    %163 = vmatpush1.msra.mxu0 %v60
    %164 = vmatprep.subr.mxu0 0.0
    %165 = vmatpush1.msra.mxu0 %v59
    %166 = vmatprep.subr.mxu0 0.0
    %167 = vmatpush1.msra.mxu0 %v58
    %168 = vmatprep.subr.mxu0 0.0
    %169 = vmatpush1.msra.mxu0 %v57
    %170 = vmatprep.subr.mxu0 0.0
    %171 = vmatpush1.msra.mxu0 %v56
    %172 = vmatprep.subr.mxu0 0.0
    %173 = vmatpush1.msra.mxu0 %v55
    %174 = vmatprep.subr.mxu0 0.0
    %175 = vmatpush1.msra.mxu0 %v54
    %176 = vmatprep.subr.mxu0 0.0
    %177 = vmatpush1.msra.mxu0 %v53
    %178 = vmatprep.subr.mxu0 0.0
    %179 = vmatpush2.msra.mxu0 0.0
    %180 = vmatprep.subr.mxu0 0.0
    %181 = vmatpush2.msra.mxu0 0.0
    %182 = vmatprep.subr.mxu0 0.0
    %183 = vmatpush2.msra.mxu0 0.0
    %184 = vmatprep.subr.mxu0 0.0
    %185 = vmatpush2.msra.mxu0 0.0
    %186 = vmatprep.subr.mxu0 0.0
    %187 = vmatpush2.msra.mxu0 0.0
    %188 = vmatprep.subr.mxu0 0.0
    %189 = vmatpush2.msra.mxu0 0.0
    %190 = vmatprep.subr.mxu0 0.0
    %191 = vmatpush2.msra.mxu0 0.0
    %192 = vmatprep.subr.mxu0 0.0
    %193 = vmatpush2.msra.mxu0 0.0
    %194 = vmatprep.subr.mxu0 0.0
    %195 = vmatpush2.msra.mxu0 0.0
    %196 = vmatprep.subr.mxu0 0.0
    %197 = vmatpush2.msra.mxu0 0.0
    %198 = vmatprep.subr.mxu0 0.0
    %199 = vmatpush2.msra.mxu0 0.0
    %200 = vmatprep.subr.mxu0 0.0
    %201 = vmatpush2.msra.mxu0 0.0
    %202 = vmatprep.subr.mxu0 0.0
    %203 = vmatpush2.msra.mxu0 0.0
    %204 = vmatprep.subr.mxu0 0.0
    %205 = vmatpush2.msra.mxu0 0.0
    %206 = vmatprep.subr.mxu0 0.0
    %207 = vmatpush2.msra.mxu0 0.0
    %208 = vmatprep.subr.mxu0 0.0
    %209 = vmatpush2.msra.mxu0 0.0
    %210 = vmatprep.mubr.f32.mxu0 0.0
    %211 = vmatmul.mubr.f32.gmra.mxu0 %v20
    %v212 = vpop.f32.mrf.mxu0
    %v213 = vadd.f32 %v143, %v212
    %v214 = vpop.f32.mrf.mxu0
    %215 = vdwg.mxu0
    %v216 = vmul.f32 %v213, %v213
    %217 = vadd.xlane.f32.xlu0 %v216
    %v218 = vpop.xlane.xlu0 %217
    %v219 = vrsqrt.pop %v218
    %v220 = vmul.f32 %v213, %v219
    %221 = vst [vmem:[#allocation2] sm:$0xff] %v220
    // Predicated region
    $region14: #{text_encoder.1} parent=1 // pred_check
      _
    $region15: #{text_encoder.1} parent=1 // pred_check_branch
      %223 = sbr.rel (0) target = $region17
    $region16: #{text_encoder.1} parent=1 // pred_region
      %s225 = ssub.s32 128, 128
      %226 = vsyncadd [#allocation3], %s225
      %s228 = sshll.u32 [#allocation2], 4
      %s229 = int_to_ptr.vmem [resolvable:$true] %s228
      %231 = dma.vmem_to_hbm [thread:$0]  %s229, 128, %s3, [#allocation3]
    $region17: #{text_encoder.1} parent=1 // pred_fallthru
      _
    // Predicated region
    $region18: #{text_encoder.1} parent=1 // pred_check
      _
    $region19: #{text_encoder.1} parent=1 // pred_check_branch
      %233 = sbr.rel (0) target = $region21
    $region20: #{text_encoder.1} parent=1 // pred_region
      %234 = dma.done [#allocation3], 128
    $region21: #{text_encoder.1} parent=1 // pred_fallthru
      _
    %235 = vsyncpa [#allocation3], 1

</llo_original>
